<compile_context>
chip_gen: v7x
topology: tpu7x:2x2x1
jax: 0.10.0
libtpu: 0.0.40
codegen_flags: <defaults>
</compile_context>

<pallas_src>
import math

import jax
import jax.numpy as jnp
from jax import lax
from jax.experimental import pallas as pl
from jax.experimental.pallas import tpu as pltpu


def _cdiv(a, b):
    return -(-a // b)


def _round_up(a, m):
    return _cdiv(a, m) * m


def _vmem_limit_bytes():
    """Per-generation VMEM limit with headroom under the physical capacity."""
    try:
        cap = int(pltpu.get_tpu_info().vmem_capacity_bytes)
    except Exception:
        return 32 * 1024 * 1024                      # conservative, safe everywhere
    if cap >= 128 * 1024 * 1024:                     # v5e / v6e: 128 MiB physical
        return 96 * 1024 * 1024
    # v7x: 64 MiB physical per TensorCore
    return max(32 * 1024 * 1024, min(cap * 3 // 4, 48 * 1024 * 1024))


def _make_kernel(N, C, tvr, steps, v_total, needs_mask):
    """Build the per-tile kernel (all sizes are static Python ints)."""
    f8 = tvr // 8

    def kernel(logits_ref, labels_ref, int_ref, den_ref, ce_ref):
        # logits_ref: [N, C, tvr, 128]  native dtype (f32/bf16)
        # labels_ref: [N, tvr, 128]     native dtype (float or narrow-int labels)
        # int_ref:    [1, N*C, 8, 128] f32  sum_spatial( p * y )
        # den_ref:    [1, N*C, 8, 128] f32  sum_spatial( p^2 + y )
        # ce_ref:     [1, N,   8, 128] f32  sum_spatial( logsumexp - x[label] )
        v = pl.program_id(1)

        @pl.when(v == 0)
        def _():
            int_ref[...] = jnp.zeros_like(int_ref)
            den_ref[...] = jnp.zeros_like(den_ref)
            ce_ref[...] = jnp.zeros_like(ce_ref)

        x = logits_ref[...].astype(jnp.float32)           # [N, C, tvr, 128]
        labels = labels_ref[...].astype(jnp.int32)        # [N, tvr, 128]

        # channel softmax pieces; axis=1 is a major axis -> pure vreg-wise VPU ops
        m = jnp.max(x, axis=1, keepdims=True)             # [N, 1, tvr, 128]
        xm = x - m
        e = jnp.exp(xm)                                   # EUP
        s = jnp.sum(e, axis=1, keepdims=True)             # [N, 1, tvr, 128]
        inv_s = pl.reciprocal(s, approx=True)             # EUP seed (idle slot)
        inv_s = inv_s * (2.0 - s * inv_s)                 # one Newton step -> f32-accurate
        p = e * inv_s                                     # softmax
        log_s = jnp.log(s)                                # [N, 1, tvr, 128]

        # one-hot as a bool mask; selects instead of f32 multiplies
        c_iota = lax.broadcasted_iota(jnp.int32, x.shape, 1)
        mask = labels[:, None, :, :] == c_iota            # [N, C, tvr, 128] bool

        if needs_mask:
            # zero the contribution of spatial-padding voxels (flat index >= V)
            row0 = (pl.program_id(0) * steps + v) * tvr
            ridx = lax.broadcasted_iota(jnp.int32, (tvr, 128), 0) + row0
            lidx = lax.broadcasted_iota(jnp.int32, (tvr, 128), 1)
            valid = (ridx * 128 + lidx) < v_total          # [tvr, 128] bool
            p = jnp.where(valid[None, None], p, 0.0)

        py = jnp.where(mask, p, 0.0)                       # p * y        (y one-hot)
        pp = p * p
        dn = jnp.where(mask, pp + 1.0, pp)                 # p^2 + y^2    (y^2 == y)

        # per-voxel CE = log(s) - (x - m)[label]  ==  logsumexp(x) - x[label]
        xm_sel = jnp.sum(jnp.where(mask, xm, 0.0), axis=1)        # [N, tvr, 128]
        ce_vox = log_s[:, 0] - xm_sel                             # [N, tvr, 128]
        if needs_mask:
            ce_vox = jnp.where(valid[None], ce_vox, 0.0)

        # fold ONLY the tvr axis (vreg-wise VPU adds) into lane-dense [.,8,128]
        # accumulators; the 8x128 -> 1 reduce is deferred to the wrapper.
        int_ref[0] += jnp.sum(py.reshape(N * C, f8, 8, 128), axis=1)
        den_ref[0] += jnp.sum(dn.reshape(N * C, f8, 8, 128), axis=1)
        ce_ref[0] += jnp.sum(ce_vox.reshape(N, f8, 8, 128), axis=1)

    return kernel


@jax.jit
def combined_wseg_dice(predict, target):
    """predict: [N, C, *spatial] logits; target: [N, 1, *spatial] integer class labels."""
    # TODO(synk): the PyTorch forward also accepts an already-one-hot target with
    # target.shape == predict.shape; only the common [N,1,...] label-map form is handled.
    N, C = predict.shape[:2]
    V = math.prod(predict.shape[2:])

    logit_bytes = predict.dtype.itemsize
    label_bytes = target.dtype.itemsize
    # (8,128) layout rule scaled by dtype sublane packing (f32->8, bf16->16, i8/u8->32)
    mult = max(8, 32 // logit_bytes, 32 // label_bytes)

    # --- tile size: budget double-buffered input DMA tiles PLUS ~6 full-size f32
    # in-kernel temporaries (x, xm, e/p, mask-selects, products) per tvr-row.
    vmem_limit = _vmem_limit_bytes()
    row = 128 * N                                          # elements per tvr-row
    bytes_per_tvr = (2 * row * (C * logit_bytes + label_bytes)   # pipelined input buffers
                     + 6 * row * C * 4                           # full-size f32 temporaries
                     + 6 * row * 4)                              # channel-reduced temporaries
    usable = max(0, vmem_limit - 6 * 1024 * 1024)          # headroom: accums + compiler scratch
    tvr_cap = max(mult, (min(512, usable // bytes_per_tvr) // mult) * mult)

    # --- fixed P=2 "parallel" split of the spatial stream (shards across the two
    # TensorCores of a v7x megacore; harmless serial loop on 1-TC chips). The
    # flattened spatial axis is padded so tiling never needs a full-extent block.
    # TODO(synk): if profiling shows the P axis is not sharded across v7x cores,
    # switch the leading grid axis to pltpu.CORE_PARALLEL.
    P = 2
    vr_raw = _cdiv(V, 128)
    tvr = min(tvr_cap, _round_up(_cdiv(vr_raw, P), mult))
    steps = _cdiv(vr_raw, P * tvr)
    vr_pad = P * steps * tvr
    v_pad = vr_pad * 128
    needs_mask = v_pad != V

    logits = predict.reshape(N, C, V)
    labels = target.reshape(N, V)                          # drops the size-1 channel dim
    if needs_mask:
        # pad labels with the out-of-range class C so their one-hot mask is all-False
        logits = jnp.pad(logits, ((0, 0), (0, 0), (0, v_pad - V)))
        labels = jnp.pad(labels, ((0, 0), (0, v_pad - V)), constant_values=C)
    logits = logits.reshape(N, C, vr_pad, 128)             # native dtype; free when unpadded
    labels = labels.reshape(N, vr_pad, 128)

    kernel = _make_kernel(N, C, tvr, steps, V, needs_mask)

    int_p, den_p, ce_p = pl.pallas_call(
        kernel,
        out_shape=(
            jax.ShapeDtypeStruct((P, N * C, 8, 128), jnp.float32),
            jax.ShapeDtypeStruct((P, N * C, 8, 128), jnp.float32),
            jax.ShapeDtypeStruct((P, N, 8, 128), jnp.float32),
        ),
        grid_spec=pltpu.PrefetchScalarGridSpec(
            num_scalar_prefetch=0,
            grid=(P, steps),
            in_specs=[
                pl.BlockSpec((N, C, tvr, 128), lambda p, v: (0, 0, p * steps + v, 0)),
                pl.BlockSpec((N, tvr, 128), lambda p, v: (0, p * steps + v, 0)),
            ],
            out_specs=[
                pl.BlockSpec((1, N * C, 8, 128), lambda p, v: (p, 0, 0, 0)),
                pl.BlockSpec((1, N * C, 8, 128), lambda p, v: (p, 0, 0, 0)),
                pl.BlockSpec((1, N, 8, 128), lambda p, v: (p, 0, 0, 0)),
            ],
        ),
        compiler_params=pltpu.CompilerParams(
            dimension_semantics=("parallel", "arbitrary"),
            vmem_limit_bytes=vmem_limit,
        ),
    )(logits, labels)

    # final (tiny) cross-lane / sublane / core reductions in plain JAX
    intersect = jnp.sum(int_p, axis=(0, 2, 3)).reshape(N, C)
    denom = jnp.sum(den_p, axis=(0, 2, 3)).reshape(N, C)
    ce_sum = jnp.sum(ce_p)
    smooth = 1.0
    ce_loss = ce_sum / (N * V)                             # mean over the true N*spatial voxels
    dc = 2.0 * (intersect + smooth) / (denom + smooth)     # [N, C]
    dc_loss = -jnp.mean(dc)
    return dc_loss + ce_loss


def _reference(predict, target):
    """Pure-JAX reference mirroring the PyTorch forward."""
    N, C = predict.shape[:2]
    labels = target[:, 0].astype(jnp.int32)
    logp = jax.nn.log_softmax(predict.astype(jnp.float32), axis=1)
    ce = -jnp.mean(jnp.take_along_axis(logp, labels[:, None], axis=1))
    p = jax.nn.softmax(predict.astype(jnp.float32), axis=1)
    y = jax.nn.one_hot(labels, C, axis=1, dtype=jnp.float32)
    axes = tuple(range(2, predict.ndim))
    inter = jnp.sum(p * y, axis=axes) + 1.0
    den = jnp.sum(p * p + y * y, axis=axes) + 1.0
    dc = jnp.mean(2.0 * inter / den)
    return -dc + ce


if __name__ == "__main__":
    key = jax.random.PRNGKey(0)
    k1, k2, k3, k4 = jax.random.split(key, 4)

    # Case 1: spatial size a multiple of 128 (unpadded fast path).
    N, C, D, H, W = 2, 4, 8, 16, 16
    predict = jax.random.normal(k1, (N, C, D, H, W), dtype=jnp.float32)
    # target carries integer class labels (stored as float, like nnU-Net segmentations)
    target = jax.random.randint(k2, (N, 1, D, H, W), 0, C).astype(jnp.float32)
    loss = jax.block_until_ready(combined_wseg_dice(predict, target))
    ref = jax.block_until_ready(_reference(predict, target))
    assert jnp.allclose(loss, ref, atol=1e-4, rtol=1e-4), (loss, ref)

    # Case 2: awkward spatial size (exercises the pad + in-kernel validity-mask path).
    N2, C2, D2, H2, W2 = 2, 3, 5, 7, 9
    predict2 = jax.random.normal(k3, (N2, C2, D2, H2, W2), dtype=jnp.float32)
    target2 = jax.random.randint(k4, (N2, 1, D2, H2, W2), 0, C2).astype(jnp.float32)
    loss2 = jax.block_until_ready(combined_wseg_dice(predict2, target2))
    ref2 = jax.block_until_ready(_reference(predict2, target2))
    assert jnp.allclose(loss2, ref2, atol=1e-4, rtol=1e-4), (loss2, ref2)

    print("KERNEL_OK")
</pallas_src>

<mosaic_0001>
module attributes {stable_mosaic.version = 11 : i64} {
  func.func @kernel(%arg0: i32, %arg1: i32, %arg2: memref<2x4x8x128xf32, #tpu.memory_space<vmem>>, %arg3: memref<2x8x128xf32, #tpu.memory_space<vmem>>, %arg4: memref<1x8x8x128xf32, #tpu.memory_space<vmem>>, %arg5: memref<1x8x8x128xf32, #tpu.memory_space<vmem>>, %arg6: memref<1x2x8x128xf32, #tpu.memory_space<vmem>>) attributes {dimension_semantics = [#tpu.dimension_semantics<parallel>, #tpu.dimension_semantics<arbitrary>], iteration_bounds = array<i64: 2, 1>, scalar_prefetch = 0 : i64, scratch_operands = 0 : i64, tpu.core_type = #tpu.core_type<tc>, window_params = [{transform_indices = @transform_0, window_bounds = array<i64: 2, 4, 8, 128>}, {transform_indices = @transform_1, window_bounds = array<i64: 2, 8, 128>}, {transform_indices = @transform_2, window_bounds = array<i64: 1, 8, 8, 128>}, {transform_indices = @transform_3, window_bounds = array<i64: 1, 8, 8, 128>}, {transform_indices = @transform_4, window_bounds = array<i64: 1, 2, 8, 128>}]} {
    %c0_i32 = arith.constant 0 : i32
    %0 = arith.cmpi eq, %arg1, %c0_i32 : i32
    %1 = arith.extui %0 : i1 to i32
    %c0_i32_0 = arith.constant 0 : i32
    %2 = arith.cmpi ne, %1, %c0_i32_0 : i32
    scf.if %2 {
      %cst_40 = arith.constant 0.000000e+00 : f32
      %60 = vector.broadcast %cst_40 : f32 to vector<1x8x8x128xf32>
      %c0_41 = arith.constant 0 : index
      %c0_42 = arith.constant 0 : index
      %c0_43 = arith.constant 0 : index
      %c0_44 = arith.constant 0 : index
      %61 = vector.load %arg4[%c0_41, %c0_42, %c0_43, %c0_44] : memref<1x8x8x128xf32, #tpu.memory_space<vmem>>, vector<1x8x8x128xf32>
      tpu.vector_store %arg4[%c0_41, %c0_42, %c0_43, %c0_44], %60 {strides = array<i32>} : memref<1x8x8x128xf32, #tpu.memory_space<vmem>>, vector<1x8x8x128xf32>,
      %cst_45 = arith.constant 0.000000e+00 : f32
      %62 = vector.broadcast %cst_45 : f32 to vector<1x8x8x128xf32>
      %c0_46 = arith.constant 0 : index
      %c0_47 = arith.constant 0 : index
      %c0_48 = arith.constant 0 : index
      %c0_49 = arith.constant 0 : index
      %63 = vector.load %arg5[%c0_46, %c0_47, %c0_48, %c0_49] : memref<1x8x8x128xf32, #tpu.memory_space<vmem>>, vector<1x8x8x128xf32>
      tpu.vector_store %arg5[%c0_46, %c0_47, %c0_48, %c0_49], %62 {strides = array<i32>} : memref<1x8x8x128xf32, #tpu.memory_space<vmem>>, vector<1x8x8x128xf32>,
      %cst_50 = arith.constant 0.000000e+00 : f32
      %64 = vector.broadcast %cst_50 : f32 to vector<1x2x8x128xf32>
      %c0_51 = arith.constant 0 : index
      %c0_52 = arith.constant 0 : index
      %c0_53 = arith.constant 0 : index
      %c0_54 = arith.constant 0 : index
      %65 = vector.load %arg6[%c0_51, %c0_52, %c0_53, %c0_54] : memref<1x2x8x128xf32, #tpu.memory_space<vmem>>, vector<1x2x8x128xf32>
      tpu.vector_store %arg6[%c0_51, %c0_52, %c0_53, %c0_54], %64 {strides = array<i32>} : memref<1x2x8x128xf32, #tpu.memory_space<vmem>>, vector<1x2x8x128xf32>,
    } else {
    }
    %c0 = arith.constant 0 : index
    %c0_1 = arith.constant 0 : index
    %c0_2 = arith.constant 0 : index
    %c0_3 = arith.constant 0 : index
    %3 = vector.load %arg2[%c0, %c0_1, %c0_2, %c0_3] : memref<2x4x8x128xf32, #tpu.memory_space<vmem>>, vector<2x4x8x128xf32>
    %c0_4 = arith.constant 0 : index
    %c0_5 = arith.constant 0 : index
    %c0_6 = arith.constant 0 : index
    %4 = vector.load %arg3[%c0_4, %c0_5, %c0_6] : memref<2x8x128xf32, #tpu.memory_space<vmem>>, vector<2x8x128xf32>
    %5 = arith.fptosi %4 : vector<2x8x128xf32> to vector<2x8x128xi32>
    %cst = arith.constant dense<0xFF800000> : vector<2x8x128xf32>
    %6 = vector.multi_reduction <maximumf>, %3, %cst [1] : vector<2x4x8x128xf32> to vector<2x8x128xf32>
    %7 = vector.shape_cast %6 : vector<2x8x128xf32> to vector<2x1x8x128xf32>
    %8 = vector.broadcast %7 : vector<2x1x8x128xf32> to vector<2x4x8x128xf32>
    %9 = arith.subf %3, %8 : vector<2x4x8x128xf32>
    %10 = math.exp %9 : vector<2x4x8x128xf32>
    %cst_7 = arith.constant dense<0.000000e+00> : vector<2x8x128xf32>
    %11 = vector.multi_reduction <add>, %10, %cst_7 [1] : vector<2x4x8x128xf32> to vector<2x8x128xf32>
    %12 = vector.shape_cast %11 : vector<2x8x128xf32> to vector<2x1x8x128xf32>
    %13 = tpu.reciprocal %12 {approx = true} : vector<2x1x8x128xf32> -> vector<2x1x8x128xf32>
    %14 = arith.mulf %12, %13 : vector<2x1x8x128xf32>
    %cst_8 = arith.constant 2.000000e+00 : f32
    %15 = vector.broadcast %cst_8 : f32 to vector<2x1x8x128xf32>
    %16 = arith.subf %15, %14 : vector<2x1x8x128xf32>
    %17 = arith.mulf %13, %16 : vector<2x1x8x128xf32>
    %18 = vector.broadcast %17 : vector<2x1x8x128xf32> to vector<2x4x8x128xf32>
    %19 = arith.mulf %10, %18 : vector<2x4x8x128xf32>
    %20 = math.log %12 : vector<2x1x8x128xf32>
    %21 = tpu.iota {dimensions = array<i32: 1>} : vector<2x4x8x128xi32>
    %22 = vector.shape_cast %5 : vector<2x8x128xi32> to vector<2x1x8x128xi32>
    %23 = vector.broadcast %22 : vector<2x1x8x128xi32> to vector<2x4x8x128xi32>
    %24 = arith.cmpi eq, %23, %21 : vector<2x4x8x128xi32>
    %cst_9 = arith.constant 0.000000e+00 : f32
    %25 = vector.broadcast %cst_9 : f32 to vector<2x4x8x128xf32>
    %26 = arith.select %24, %19, %25 : vector<2x4x8x128xi1>, vector<2x4x8x128xf32>
    %27 = arith.mulf %19, %19 : vector<2x4x8x128xf32>
    %cst_10 = arith.constant 1.000000e+00 : f32
    %28 = vector.broadcast %cst_10 : f32 to vector<2x4x8x128xf32>
    %29 = arith.addf %27, %28 : vector<2x4x8x128xf32>
    %30 = arith.select %24, %29, %27 : vector<2x4x8x128xi1>, vector<2x4x8x128xf32>
    %cst_11 = arith.constant 0.000000e+00 : f32
    %31 = vector.broadcast %cst_11 : f32 to vector<2x4x8x128xf32>
    %32 = arith.select %24, %9, %31 : vector<2x4x8x128xi1>, vector<2x4x8x128xf32>
    %cst_12 = arith.constant dense<0.000000e+00> : vector<2x8x128xf32>
    %33 = vector.multi_reduction <add>, %32, %cst_12 [1] : vector<2x4x8x128xf32> to vector<2x8x128xf32>
    %34 = vector.shape_cast %20 : vector<2x1x8x128xf32> to vector<2x8x128xf32>
    %35 = arith.subf %34, %33 : vector<2x8x128xf32>
    %c0_13 = arith.constant 0 : index
    %c0_14 = arith.constant 0 : index
    %c0_15 = arith.constant 0 : index
    %c0_16 = arith.constant 0 : index
    %36 = vector.load %arg4[%c0_13, %c0_14, %c0_15, %c0_16] : memref<1x8x8x128xf32, #tpu.memory_space<vmem>>, vector<1x8x8x128xf32>
    %37 = vector.shape_cast %36 : vector<1x8x8x128xf32> to vector<8x8x128xf32>
    %38 = vector.shape_cast %26 : vector<2x4x8x128xf32> to vector<8x1x8x128xf32>
    %cst_17 = arith.constant dense<0.000000e+00> : vector<8x8x128xf32>
    %39 = vector.multi_reduction <add>, %38, %cst_17 [1] : vector<8x1x8x128xf32> to vector<8x8x128xf32>
    %40 = arith.addf %37, %39 : vector<8x8x128xf32>
    %c0_18 = arith.constant 0 : index
    %c0_19 = arith.constant 0 : index
    %c0_20 = arith.constant 0 : index
    %c0_21 = arith.constant 0 : index
    %41 = vector.load %arg4[%c0_18, %c0_19, %c0_20, %c0_21] : memref<1x8x8x128xf32, #tpu.memory_space<vmem>>, vector<1x8x8x128xf32>
    %42 = vector.shape_cast %41 : vector<1x8x8x128xf32> to vector<8x8x128xf32>
    %43 = vector.shape_cast %40 : vector<8x8x128xf32> to vector<1x8x8x128xf32>
    tpu.vector_store %arg4[%c0_18, %c0_19, %c0_20, %c0_21], %43 {strides = array<i32>} : memref<1x8x8x128xf32, #tpu.memory_space<vmem>>, vector<1x8x8x128xf32>,
    %c0_22 = arith.constant 0 : index
    %c0_23 = arith.constant 0 : index
    %c0_24 = arith.constant 0 : index
    %c0_25 = arith.constant 0 : index
    %44 = vector.load %arg5[%c0_22, %c0_23, %c0_24, %c0_25] : memref<1x8x8x128xf32, #tpu.memory_space<vmem>>, vector<1x8x8x128xf32>
    %45 = vector.shape_cast %44 : vector<1x8x8x128xf32> to vector<8x8x128xf32>
    %46 = vector.shape_cast %30 : vector<2x4x8x128xf32> to vector<8x1x8x128xf32>
    %cst_26 = arith.constant dense<0.000000e+00> : vector<8x8x128xf32>
    %47 = vector.multi_reduction <add>, %46, %cst_26 [1] : vector<8x1x8x128xf32> to vector<8x8x128xf32>
    %48 = arith.addf %45, %47 : vector<8x8x128xf32>
    %c0_27 = arith.constant 0 : index
    %c0_28 = arith.constant 0 : index
    %c0_29 = arith.constant 0 : index
    %c0_30 = arith.constant 0 : index
    %49 = vector.load %arg5[%c0_27, %c0_28, %c0_29, %c0_30] : memref<1x8x8x128xf32, #tpu.memory_space<vmem>>, vector<1x8x8x128xf32>
    %50 = vector.shape_cast %49 : vector<1x8x8x128xf32> to vector<8x8x128xf32>
    %51 = vector.shape_cast %48 : vector<8x8x128xf32> to vector<1x8x8x128xf32>
    tpu.vector_store %arg5[%c0_27, %c0_28, %c0_29, %c0_30], %51 {strides = array<i32>} : memref<1x8x8x128xf32, #tpu.memory_space<vmem>>, vector<1x8x8x128xf32>,
    %c0_31 = arith.constant 0 : index
    %c0_32 = arith.constant 0 : index
    %c0_33 = arith.constant 0 : index
    %c0_34 = arith.constant 0 : index
    %52 = vector.load %arg6[%c0_31, %c0_32, %c0_33, %c0_34] : memref<1x2x8x128xf32, #tpu.memory_space<vmem>>, vector<1x2x8x128xf32>
    %53 = vector.shape_cast %52 : vector<1x2x8x128xf32> to vector<2x8x128xf32>
    %54 = vector.shape_cast %35 : vector<2x8x128xf32> to vector<2x1x8x128xf32>
    %cst_35 = arith.constant dense<0.000000e+00> : vector<2x8x128xf32>
    %55 = vector.multi_reduction <add>, %54, %cst_35 [1] : vector<2x1x8x128xf32> to vector<2x8x128xf32>
    %56 = arith.addf %53, %55 : vector<2x8x128xf32>
    %c0_36 = arith.constant 0 : index
    %c0_37 = arith.constant 0 : index
    %c0_38 = arith.constant 0 : index
    %c0_39 = arith.constant 0 : index
    %57 = vector.load %arg6[%c0_36, %c0_37, %c0_38, %c0_39] : memref<1x2x8x128xf32, #tpu.memory_space<vmem>>, vector<1x2x8x128xf32>
    %58 = vector.shape_cast %57 : vector<1x2x8x128xf32> to vector<2x8x128xf32>
    %59 = vector.shape_cast %56 : vector<2x8x128xf32> to vector<1x2x8x128xf32>
    tpu.vector_store %arg6[%c0_36, %c0_37, %c0_38, %c0_39], %59 {strides = array<i32>} : memref<1x2x8x128xf32, #tpu.memory_space<vmem>>, vector<1x2x8x128xf32>,
    return
  }
  func.func @transform_0(%arg0: i32, %arg1: i32) -> (i32, i32, i32, i32) {
    %c1_i32 = arith.constant 1 : i32
    %0 = arith.muli %arg0, %c1_i32 : i32
    %1 = arith.addi %0, %arg1 : i32
    %c0_i32 = arith.constant 0 : i32
    %c0_i32_0 = arith.constant 0 : i32
    %c0_i32_1 = arith.constant 0 : i32
    %c0_i32_2 = arith.constant 0 : i32
    return %c0_i32, %c0_i32_0, %1, %c0_i32_1 : i32, i32, i32, i32
  }
  func.func @transform_1(%arg0: i32, %arg1: i32) -> (i32, i32, i32) {
    %c1_i32 = arith.constant 1 : i32
    %0 = arith.muli %arg0, %c1_i32 : i32
    %1 = arith.addi %0, %arg1 : i32
    %c0_i32 = arith.constant 0 : i32
    %c0_i32_0 = arith.constant 0 : i32
    %c0_i32_1 = arith.constant 0 : i32
    return %c0_i32, %1, %c0_i32_0 : i32, i32, i32
  }
  func.func @transform_2(%arg0: i32, %arg1: i32) -> (i32, i32, i32, i32) {
    %c0_i32 = arith.constant 0 : i32
    %c0_i32_0 = arith.constant 0 : i32
    %c0_i32_1 = arith.constant 0 : i32
    %c0_i32_2 = arith.constant 0 : i32
    return %arg0, %c0_i32, %c0_i32_0, %c0_i32_1 : i32, i32, i32, i32
  }
  func.func @transform_3(%arg0: i32, %arg1: i32) -> (i32, i32, i32, i32) {
    %c0_i32 = arith.constant 0 : i32
    %c0_i32_0 = arith.constant 0 : i32
    %c0_i32_1 = arith.constant 0 : i32
    %c0_i32_2 = arith.constant 0 : i32
    return %arg0, %c0_i32, %c0_i32_0, %c0_i32_1 : i32, i32, i32, i32
  }
  func.func @transform_4(%arg0: i32, %arg1: i32) -> (i32, i32, i32, i32) {
    %c0_i32 = arith.constant 0 : i32
    %c0_i32_0 = arith.constant 0 : i32
    %c0_i32_1 = arith.constant 0 : i32
    %c0_i32_2 = arith.constant 0 : i32
    return %arg0, %c0_i32, %c0_i32_0, %c0_i32_1 : i32, i32, i32, i32
  }
}

</mosaic_0001>

<llo_original>
// kernel: combined_wseg_dice.1
$region0: #{combined_wseg_dice.1}
  #allocation0 [shape = 'u32[]', space=smem, size = 0x4, offset = 0x4, fixed_abs, tag = 'smem constant byte address 0x4 - core index']
  #allocation1 [shape = 'u32[144,128]{1,0:T(1,128)}', space=vmem, size = 0x12000, scoped, tag = 'internal scratch']
  %s0 = inlined_call_operand.vmem [shape: f32[2,4,16,128], index: 0, kind: input, shape index: {}]
  %s1 = inlined_call_operand.vmem [shape: f32[2,16,128], index: 1, kind: input, shape index: {}]
  %s2 = inlined_call_operand.vmem [shape: f32[2,8,8,128], index: 2, kind: output, shape index: {0}]
  %s3 = inlined_call_operand.vmem [shape: f32[2,8,8,128], index: 3, kind: output, shape index: {1}]
  %s4 = inlined_call_operand.vmem [shape: f32[2,2,8,128], index: 4, kind: output, shape index: {2}]
  %5 = xla_tuple %s2, %s3, %s4
  %s6 = sld [smem:[#allocation0]]
  $region137: #{combined_wseg_dice.1} parent=0
    _
  %s8 = ssub.s32 1, %s6
  %s9 = scalar_select 0, %s8, %s6
  $region1: #{combined_wseg_dice.1} parent=0
    #allocation2 [shape = 'u8[65536]{0}', space=vmem, size = 0x10000, scoped, tag = 'input window, operand 0']
    #allocation3 [shape = 'u8[16384]{0}', space=vmem, size = 0x4000, scoped, tag = 'input window, operand 1']
    loop: start=0, step=1, limit=4
    $region2: #{combined_wseg_dice.1} parent=1 // loop_pre_header
      _
    $region3: #{combined_wseg_dice.1} parent=1 // loop_header
      %s11 = sphi 0, %s15
      %p12 = scmp.ge.s32.totalorder %s11, 4
      %s18 = sphi 0, %s30
      %s19 = sphi 0, %s26
      %s20 = sphi 0, %s18
      %s21 = sphi 0, %s19
      %s22 = sphi 0, %s20
      %s23 = sphi 0, %s21
      %s35 = sphi 0, %s37
      %s38 = sphi 0, %s35
      %s39 = sphi 0, %s38
      %s55 = sphi 0, %s39
      %s63 = sphi 0, %s65
      %s66 = sphi 0, %s63
      %s67 = sphi 0, %s66
      %s83 = sphi 0, %s67
      %s89 = sphi 0, %s91
      %s92 = sphi 0, %s89
      %s93 = sphi 0, %s92
      %s109 = sphi 0, %s93
      %s115 = sphi 0, %s117
      %s118 = sphi 0, %s115
      %s119 = sphi 0, %s118
      %s135 = sphi 0, %s119
      %s141 = sphi 0, %s143
      %s144 = sphi 0, %s141
      %s145 = sphi 0, %s144
      %s161 = sphi 0, %s145
    $region4: #{combined_wseg_dice.1} parent=1 // loop_header_branch
      %14 = sbr.rel (%p12) target = $region8
    $region5: #{combined_wseg_dice.1} parent=1 // loop_body
      %s16 = ssub.s32 %s11, 1
      %s17 = ssub.s32 %s11, 2
      %s24 = sadd.s32 1, %s19
      %p25 = scmp.ge.s32.totalorder %s24, 1
      %s26 = scalar_select %p25, 0, %s24
      %s27 = sadd.s32 1, %s18
      %s28 = scalar_select %p25, %s27, %s18
      %p29 = scmp.ge.s32.totalorder %s28, 2
      %s30 = scalar_select %p29, 0, %s28
      %s31 = sadd.s32 %s18, %s19
      %s32 = sadd.s32 %s30, %s26
      %s33 = ssub.s32 %s31, %s32
      %p34 = scmp.eq.s32.totalorder %s33, 0
      %s36 = sadd.s32 %s35, 1
      %s37 = scalar_select %p34, %s35, %s36
      %p40 = pneg %p34
      %p41 = scmp.eq.s32.totalorder %s11, 1
      %p42 = por %p40, %p41
      %p43 = scmp.ne.s32.totalorder %s35, %s38
      %p44 = scmp.eq.s32.totalorder %s11, 0
      %p45 = por %p43, %p44
      %p46 = scmp.ne.s32.totalorder %s35, %s38
      %p47 = scmp.eq.s32.totalorder %s16, 1
      %p48 = por %p46, %p47
      %p49 = scmp.ne.s32.totalorder %s38, %s39
      %p50 = scmp.eq.s32.totalorder %s16, 0
      %p51 = por %p49, %p50
      %p52 = scmp.ne.s32.totalorder %s38, %s39
      %p53 = scmp.eq.s32.totalorder %s17, 1
      %p54 = por %p52, %p53
      %p56 = scmp.ne.s32.totalorder %s39, %s55
      %p57 = scmp.eq.s32.totalorder %s17, 0
      %p58 = por %p56, %p57
      %s59 = sadd.s32 %s18, %s19
      %s60 = sadd.s32 %s30, %s26
      %s61 = ssub.s32 %s59, %s60
      %p62 = scmp.eq.s32.totalorder %s61, 0
      %s64 = sadd.s32 %s63, 1
      %s65 = scalar_select %p62, %s63, %s64
      %p68 = pneg %p62
      %p69 = scmp.eq.s32.totalorder %s11, 1
      %p70 = por %p68, %p69
      %p71 = scmp.ne.s32.totalorder %s63, %s66
      %p72 = scmp.eq.s32.totalorder %s11, 0
      %p73 = por %p71, %p72
      %p74 = scmp.ne.s32.totalorder %s63, %s66
      %p75 = scmp.eq.s32.totalorder %s16, 1
      %p76 = por %p74, %p75
      %p77 = scmp.ne.s32.totalorder %s66, %s67
      %p78 = scmp.eq.s32.totalorder %s16, 0
      %p79 = por %p77, %p78
      %p80 = scmp.ne.s32.totalorder %s66, %s67
      %p81 = scmp.eq.s32.totalorder %s17, 1
      %p82 = por %p80, %p81
      %p84 = scmp.ne.s32.totalorder %s67, %s83
      %p85 = scmp.eq.s32.totalorder %s17, 0
      %p86 = por %p84, %p85
      %s87 = ssub.s32 %s18, %s30
      %p88 = scmp.eq.s32.totalorder %s87, 0
      %s90 = sadd.s32 %s89, 1
      %s91 = scalar_select %p88, %s89, %s90
      %p94 = pneg %p88
      %p95 = scmp.eq.s32.totalorder %s11, 1
      %p96 = por %p94, %p95
      %p97 = scmp.ne.s32.totalorder %s89, %s92
      %p98 = scmp.eq.s32.totalorder %s11, 0
      %p99 = por %p97, %p98
      %p100 = scmp.ne.s32.totalorder %s89, %s92
      %p101 = scmp.eq.s32.totalorder %s16, 1
      %p102 = por %p100, %p101
      %p103 = scmp.ne.s32.totalorder %s92, %s93
      %p104 = scmp.eq.s32.totalorder %s16, 0
      %p105 = por %p103, %p104
      %p106 = scmp.ne.s32.totalorder %s92, %s93
      %p107 = scmp.eq.s32.totalorder %s17, 1
      %p108 = por %p106, %p107
      %p110 = scmp.ne.s32.totalorder %s93, %s109
      %p111 = scmp.eq.s32.totalorder %s17, 0
      %p112 = por %p110, %p111
      %s113 = ssub.s32 %s18, %s30
      %p114 = scmp.eq.s32.totalorder %s113, 0
      %s116 = sadd.s32 %s115, 1
      %s117 = scalar_select %p114, %s115, %s116
      %p120 = pneg %p114
      %p121 = scmp.eq.s32.totalorder %s11, 1
      %p122 = por %p120, %p121
      %p123 = scmp.ne.s32.totalorder %s115, %s118
      %p124 = scmp.eq.s32.totalorder %s11, 0
      %p125 = por %p123, %p124
      %p126 = scmp.ne.s32.totalorder %s115, %s118
      %p127 = scmp.eq.s32.totalorder %s16, 1
      %p128 = por %p126, %p127
      %p129 = scmp.ne.s32.totalorder %s118, %s119
      %p130 = scmp.eq.s32.totalorder %s16, 0
      %p131 = por %p129, %p130
      %p132 = scmp.ne.s32.totalorder %s118, %s119
      %p133 = scmp.eq.s32.totalorder %s17, 1
      %p134 = por %p132, %p133
      %p136 = scmp.ne.s32.totalorder %s119, %s135
      %p137 = scmp.eq.s32.totalorder %s17, 0
      %p138 = por %p136, %p137
      %s139 = ssub.s32 %s18, %s30
      %p140 = scmp.eq.s32.totalorder %s139, 0
      %s142 = sadd.s32 %s141, 1
      %s143 = scalar_select %p140, %s141, %s142
      %p146 = pneg %p140
      %p147 = scmp.eq.s32.totalorder %s11, 1
      %p148 = por %p146, %p147
      %p149 = scmp.ne.s32.totalorder %s141, %s144
      %p150 = scmp.eq.s32.totalorder %s11, 0
      %p151 = por %p149, %p150
      %p152 = scmp.ne.s32.totalorder %s141, %s144
      %p153 = scmp.eq.s32.totalorder %s16, 1
      %p154 = por %p152, %p153
      %p155 = scmp.ne.s32.totalorder %s144, %s145
      %p156 = scmp.eq.s32.totalorder %s16, 0
      %p157 = por %p155, %p156
      %p158 = scmp.ne.s32.totalorder %s144, %s145
      %p159 = scmp.eq.s32.totalorder %s17, 1
      %p160 = por %p158, %p159
      %p162 = scmp.ne.s32.totalorder %s145, %s161
      %p163 = scmp.eq.s32.totalorder %s17, 0
      %p164 = por %p162, %p163
      %p165 = scmp.le.s32.totalorder 1, %s11
      %p166 = scmp.lt.s32.totalorder %s11, 3
      %p167 = pnand %p165, %p166
      %p168 = pneg %p167
      // Predicated region
      $region9: #{combined_wseg_dice.1} parent=5 // pred_check
        _
      $region10: #{combined_wseg_dice.1} parent=5 // pred_check_branch
        %170 = sbr.rel (%p167) target = $region12
      $region11: #{combined_wseg_dice.1} parent=5 // pred_region
        %s171 = ssub.s32 %s11, 1
      $region12: #{combined_wseg_dice.1} parent=5 // pred_fallthru
        _
      %p172 = scmp.lt.s32.totalorder %s11, 2
      // Predicated region
      $region13: #{combined_wseg_dice.1} parent=5 // pred_check
        %p173 = pneg %p172
      $region14: #{combined_wseg_dice.1} parent=5 // pred_check_branch
        %175 = sbr.rel (%p173) target = $region16
      $region15: #{combined_wseg_dice.1} parent=5 // pred_region
        // Predicated region
        $region17: #{combined_wseg_dice.1} parent=15 // pred_check
          %p176 = pneg %p45
        $region18: #{combined_wseg_dice.1} parent=15 // pred_check_branch
          %178 = sbr.rel (%p176) target = $region20
        $region19: #{combined_wseg_dice.1} parent=15 // pred_region
          %s179 = sand.u32 %s35, 1
          %s180 = sand.u32 %s35, 1
          %s181 = smul.addr %s180, 64
          %s182 = scalar_lea.vmem [#allocation2], %s181
          %s183 = sadd.s32 %s18, %s19
          %s184 = smul.addr %s183, 8
          %s185 = scalar_lea.vmem %s0, %s184
          // Predicated region
          $region21: #{combined_wseg_dice.1} parent=19 // pred_check
            _
          $region22: #{combined_wseg_dice.1} parent=19 // pred_check_branch
            %187 = sbr.rel (0) target = $region24
          $region23: #{combined_wseg_dice.1} parent=19 // pred_region
            // Predicated region
            $region25: #{combined_wseg_dice.1} parent=23 // pred_check
              _
            $region26: #{combined_wseg_dice.1} parent=23 // pred_check_branch
              %189 = sbr.rel (0) target = $region28
            $region27: #{combined_wseg_dice.1} parent=23 // pred_region
              // Predicated region
              $region40: #{combined_wseg_dice.1} parent=27 // pred_check
                _
              $region41: #{combined_wseg_dice.1} parent=27 // pred_check_branch
                %218 = sbr.rel (0) target = $region43
              $region42: #{combined_wseg_dice.1} parent=27 // pred_region
                loop: start=0, step=1, limit=1
                $region44: #{combined_wseg_dice.1} parent=42 // loop_pre_header
                  _
                $region45: #{combined_wseg_dice.1} parent=42 // loop_header
                  %s220 = sphi 0, %s224
                  %p221 = scmp.ge.s32.totalorder %s220, 1
                  %s225 = sphi %s185, %s185
                  %s226 = sphi %s182, %s182
                $region46: #{combined_wseg_dice.1} parent=42 // loop_header_branch
                  %223 = sbr.rel (%p221) target = $region50
                $region47: #{combined_wseg_dice.1} parent=42 // loop_body
                  %v227 = vld [vmem:[%s225] sm:$0xff]
                  %228 = vst [vmem:[%s226] sm:$0xff] %v227
                  %v229 = vld [vmem:[%s225 + $0x10] sm:$0xff]
                  %230 = vst [vmem:[%s226 + $0x8] sm:$0xff] %v229
                  %v231 = vld [vmem:[%s225 + $0x20] sm:$0xff]
                  %232 = vst [vmem:[%s226 + $0x10] sm:$0xff] %v231
                  %v233 = vld [vmem:[%s225 + $0x30] sm:$0xff]
                  %234 = vst [vmem:[%s226 + $0x18] sm:$0xff] %v233
                  %v235 = vld [vmem:[%s225 + $0x40] sm:$0xff]
                  %236 = vst [vmem:[%s226 + $0x20] sm:$0xff] %v235
                  %v237 = vld [vmem:[%s225 + $0x50] sm:$0xff]
                  %238 = vst [vmem:[%s226 + $0x28] sm:$0xff] %v237
                  %v239 = vld [vmem:[%s225 + $0x60] sm:$0xff]
                  %240 = vst [vmem:[%s226 + $0x30] sm:$0xff] %v239
                  %v241 = vld [vmem:[%s225 + $0x70] sm:$0xff]
                  %242 = vst [vmem:[%s226 + $0x38] sm:$0xff] %v241
                $region48: #{combined_wseg_dice.1} parent=42 // loop_footer
                  %s224 = sadd.s32 1, %s220
                $region49: #{combined_wseg_dice.1} parent=42 // loop_footer_branch
                  %219 = sbr.rel target = $region45
                $region50: #{combined_wseg_dice.1} parent=42 // loop_exit
                  _
              $region43: #{combined_wseg_dice.1} parent=27 // pred_fallthru
                _
              // Predicated region
              $region51: #{combined_wseg_dice.1} parent=27 // pred_check
                _
              $region52: #{combined_wseg_dice.1} parent=27 // pred_check_branch
                %244 = sbr.rel target = $region54
              $region53: #{combined_wseg_dice.1} parent=27 // pred_region
                _
              $region54: #{combined_wseg_dice.1} parent=27 // pred_fallthru
                _
            $region28: #{combined_wseg_dice.1} parent=23 // pred_fallthru
              _
            // Predicated region
            $region29: #{combined_wseg_dice.1} parent=23 // pred_check
              _
            $region30: #{combined_wseg_dice.1} parent=23 // pred_check_branch
              %191 = sbr.rel target = $region32
            $region31: #{combined_wseg_dice.1} parent=23 // pred_region
              loop: start=0, step=1, limit=1
              $region33: #{combined_wseg_dice.1} parent=31 // loop_pre_header
                _
              $region34: #{combined_wseg_dice.1} parent=31 // loop_header
                %s194 = sphi 0, %s198
                %p195 = scmp.ge.s32.totalorder %s194, 1
                %s199 = sphi %s185, %s185
                %s200 = sphi %s182, %s182
              $region35: #{combined_wseg_dice.1} parent=31 // loop_header_branch
                %197 = sbr.rel (%p195) target = $region39
              $region36: #{combined_wseg_dice.1} parent=31 // loop_body
                %v201 = vld [vmem:[%s199] sm:$0xff]
                %202 = vst [vmem:[%s200] sm:$0xff] %v201
                %v203 = vld [vmem:[%s199 + $0x10] sm:$0xff]
                %204 = vst [vmem:[%s200 + $0x8] sm:$0xff] %v203
                %v205 = vld [vmem:[%s199 + $0x20] sm:$0xff]
                %206 = vst [vmem:[%s200 + $0x10] sm:$0xff] %v205
                %v207 = vld [vmem:[%s199 + $0x30] sm:$0xff]
                %208 = vst [vmem:[%s200 + $0x18] sm:$0xff] %v207
                %v209 = vld [vmem:[%s199 + $0x40] sm:$0xff]
                %210 = vst [vmem:[%s200 + $0x20] sm:$0xff] %v209
                %v211 = vld [vmem:[%s199 + $0x50] sm:$0xff]
                %212 = vst [vmem:[%s200 + $0x28] sm:$0xff] %v211
                %v213 = vld [vmem:[%s199 + $0x60] sm:$0xff]
                %214 = vst [vmem:[%s200 + $0x30] sm:$0xff] %v213
                %v215 = vld [vmem:[%s199 + $0x70] sm:$0xff]
                %216 = vst [vmem:[%s200 + $0x38] sm:$0xff] %v215
              $region37: #{combined_wseg_dice.1} parent=31 // loop_footer
                %s198 = sadd.s32 1, %s194
              $region38: #{combined_wseg_dice.1} parent=31 // loop_footer_branch
                %193 = sbr.rel target = $region34
              $region39: #{combined_wseg_dice.1} parent=31 // loop_exit
                _
            $region32: #{combined_wseg_dice.1} parent=23 // pred_fallthru
              _
          $region24: #{combined_wseg_dice.1} parent=19 // pred_fallthru
            _
          %245 = vnop
        $region20: #{combined_wseg_dice.1} parent=15 // pred_fallthru
          _
        // Predicated region
        $region55: #{combined_wseg_dice.1} parent=15 // pred_check
          %p246 = pneg %p73
        $region56: #{combined_wseg_dice.1} parent=15 // pred_check_branch
          %248 = sbr.rel (%p246) target = $region58
        $region57: #{combined_wseg_dice.1} parent=15 // pred_region
          %s249 = sand.u32 %s63, 1
          %s250 = sand.u32 %s63, 1
          %s251 = smul.addr %s250, 16
          %s252 = scalar_lea.vmem [#allocation3], %s251
          %s253 = sadd.s32 %s18, %s19
          %s254 = smul.addr %s253, 8
          %s255 = scalar_lea.vmem %s1, %s254
          // Predicated region
          $region59: #{combined_wseg_dice.1} parent=57 // pred_check
            _
          $region60: #{combined_wseg_dice.1} parent=57 // pred_check_branch
            %257 = sbr.rel (0) target = $region62
          $region61: #{combined_wseg_dice.1} parent=57 // pred_region
            // Predicated region
            $region63: #{combined_wseg_dice.1} parent=61 // pred_check
              _
            $region64: #{combined_wseg_dice.1} parent=61 // pred_check_branch
              %259 = sbr.rel (0) target = $region66
            $region65: #{combined_wseg_dice.1} parent=61 // pred_region
              // Predicated region
              $region78: #{combined_wseg_dice.1} parent=65 // pred_check
                _
              $region79: #{combined_wseg_dice.1} parent=65 // pred_check_branch
                %276 = sbr.rel (0) target = $region81
              $region80: #{combined_wseg_dice.1} parent=65 // pred_region
                loop: start=0, step=1, limit=1
                $region82: #{combined_wseg_dice.1} parent=80 // loop_pre_header
                  _
                $region83: #{combined_wseg_dice.1} parent=80 // loop_header
                  %s278 = sphi 0, %s282
                  %p279 = scmp.ge.s32.totalorder %s278, 1
                  %s283 = sphi %s255, %s255
                  %s284 = sphi %s252, %s252
                $region84: #{combined_wseg_dice.1} parent=80 // loop_header_branch
                  %281 = sbr.rel (%p279) target = $region88
                $region85: #{combined_wseg_dice.1} parent=80 // loop_body
                  %v285 = vld [vmem:[%s283] sm:$0xff]
                  %286 = vst [vmem:[%s284] sm:$0xff] %v285
                  %v287 = vld [vmem:[%s283 + $0x10] sm:$0xff]
                  %288 = vst [vmem:[%s284 + $0x8] sm:$0xff] %v287
                $region86: #{combined_wseg_dice.1} parent=80 // loop_footer
                  %s282 = sadd.s32 1, %s278
                $region87: #{combined_wseg_dice.1} parent=80 // loop_footer_branch
                  %277 = sbr.rel target = $region83
                $region88: #{combined_wseg_dice.1} parent=80 // loop_exit
                  _
              $region81: #{combined_wseg_dice.1} parent=65 // pred_fallthru
                _
              // Predicated region
              $region89: #{combined_wseg_dice.1} parent=65 // pred_check
                _
              $region90: #{combined_wseg_dice.1} parent=65 // pred_check_branch
                %290 = sbr.rel target = $region92
              $region91: #{combined_wseg_dice.1} parent=65 // pred_region
                _
              $region92: #{combined_wseg_dice.1} parent=65 // pred_fallthru
                _
            $region66: #{combined_wseg_dice.1} parent=61 // pred_fallthru
              _
            // Predicated region
            $region67: #{combined_wseg_dice.1} parent=61 // pred_check
              _
            $region68: #{combined_wseg_dice.1} parent=61 // pred_check_branch
              %261 = sbr.rel target = $region70
            $region69: #{combined_wseg_dice.1} parent=61 // pred_region
              loop: start=0, step=1, limit=1
              $region71: #{combined_wseg_dice.1} parent=69 // loop_pre_header
                _
              $region72: #{combined_wseg_dice.1} parent=69 // loop_header
                %s264 = sphi 0, %s268
                %p265 = scmp.ge.s32.totalorder %s264, 1
                %s269 = sphi %s255, %s255
                %s270 = sphi %s252, %s252
              $region73: #{combined_wseg_dice.1} parent=69 // loop_header_branch
                %267 = sbr.rel (%p265) target = $region77
              $region74: #{combined_wseg_dice.1} parent=69 // loop_body
                %v271 = vld [vmem:[%s269] sm:$0xff]
                %272 = vst [vmem:[%s270] sm:$0xff] %v271
                %v273 = vld [vmem:[%s269 + $0x10] sm:$0xff]
                %274 = vst [vmem:[%s270 + $0x8] sm:$0xff] %v273
              $region75: #{combined_wseg_dice.1} parent=69 // loop_footer
                %s268 = sadd.s32 1, %s264
              $region76: #{combined_wseg_dice.1} parent=69 // loop_footer_branch
                %263 = sbr.rel target = $region72
              $region77: #{combined_wseg_dice.1} parent=69 // loop_exit
                _
            $region70: #{combined_wseg_dice.1} parent=61 // pred_fallthru
              _
          $region62: #{combined_wseg_dice.1} parent=57 // pred_fallthru
            _
          %291 = vnop
        $region58: #{combined_wseg_dice.1} parent=15 // pred_fallthru
          _
      $region16: #{combined_wseg_dice.1} parent=5 // pred_fallthru
        _
      %p292 = scmp.le.s32.totalorder 1, %s11
      %p293 = scmp.lt.s32.totalorder %s11, 3
      %p294 = pnand %p292, %p293
      %p295 = pneg %p294
      // Predicated region
      $region93: #{combined_wseg_dice.1} parent=5 // pred_check
        _
      $region94: #{combined_wseg_dice.1} parent=5 // pred_check_branch
        %297 = sbr.rel (%p294) target = $region96
      $region95: #{combined_wseg_dice.1} parent=5 // pred_region
        %s298 = ssub.s32 %s11, 1
        %s299 = sand.u32 %s38, 1
        %s300 = sand.u32 %s38, 1
        %s301 = smul.addr %s300, 64
        %s302 = scalar_lea.vmem [#allocation2], %s301
        // Predicated region
        $region97: #{combined_wseg_dice.1} parent=95 // pred_check
          %p303 = pneg %p51
        $region98: #{combined_wseg_dice.1} parent=95 // pred_check_branch
          %305 = sbr.rel (%p303) target = $region100
        $region99: #{combined_wseg_dice.1} parent=95 // pred_region
          _
        $region100: #{combined_wseg_dice.1} parent=95 // pred_fallthru
          _
        %s306 = sand.u32 %s66, 1
        %s307 = sand.u32 %s66, 1
        %s308 = smul.addr %s307, 16
        %s309 = scalar_lea.vmem [#allocation3], %s308
        // Predicated region
        $region101: #{combined_wseg_dice.1} parent=95 // pred_check
          %p310 = pneg %p79
        $region102: #{combined_wseg_dice.1} parent=95 // pred_check_branch
          %312 = sbr.rel (%p310) target = $region104
        $region103: #{combined_wseg_dice.1} parent=95 // pred_region
          _
        $region104: #{combined_wseg_dice.1} parent=95 // pred_fallthru
          _
        %s313 = sand.u32 %s38, 1
        %s314 = sand.u32 %s38, 1
        %s315 = smul.addr %s314, 64
        %s316 = scalar_lea.vmem [#allocation2], %s315
        %p317 = pneg %p51
        %p318 = pneg %p48
        %s319 = sand.u32 %s66, 1
        %s320 = sand.u32 %s66, 1
        %s321 = smul.addr %s320, 16
        %s322 = scalar_lea.vmem [#allocation3], %s321
        %p323 = pneg %p79
        %p324 = pneg %p76
        %p325 = pneg %p105
        %p326 = pneg %p102
        %p327 = scmp.lt.s32.totalorder %s20, 1
        %s328 = scalar_select %p327, %s20, 1
        %s329 = smul.addr %s328, 8
        %s330 = smul.addr %s329, 8
        %s331 = scalar_lea.vmem %s2, %s330
        %p332 = pneg %p131
        %p333 = pneg %p128
        %p334 = scmp.lt.s32.totalorder %s20, 1
        %s335 = scalar_select %p334, %s20, 1
        %s336 = smul.addr %s335, 8
        %s337 = smul.addr %s336, 8
        %s338 = scalar_lea.vmem %s3, %s337
        %p339 = pneg %p157
        %p340 = pneg %p154
        %p341 = scmp.lt.s32.totalorder %s20, 1
        %s342 = scalar_select %p341, %s20, 1
        %s343 = smul.addr %s342, 2
        %s344 = smul.addr %s343, 8
        %s345 = scalar_lea.vmem %s4, %s344
        %s346 = sadd.s32 %s20, %s21
        %s347 = sadd.s32 %s20, %s21
        %p348 = scmp.lt.s32.totalorder %s20, 1
        %s349 = scalar_select %p348, %s20, 1
        %s350 = smul.addr %s349, 8
        %s351 = smul.addr %s350, 8
        %s352 = scalar_lea.vmem %s2, %s351
        %p353 = scmp.lt.s32.totalorder %s20, 1
        %s354 = scalar_select %p353, %s20, 1
        %s355 = smul.addr %s354, 8
        %s356 = smul.addr %s355, 8
        %s357 = scalar_lea.vmem %s3, %s356
        %p358 = scmp.lt.s32.totalorder %s20, 1
        %s359 = scalar_select %p358, %s20, 1
        %s360 = smul.addr %s359, 2
        %s361 = smul.addr %s360, 8
        %s362 = scalar_lea.vmem %s4, %s361
        %p363 = scmp.eq.s32.totalorder %s21, 0
        // Predicated region
        $region105: #{combined_wseg_dice.1} parent=95 // pred_check
          %p364 = pneg %p363
        $region106: #{combined_wseg_dice.1} parent=95 // pred_check_branch
          %366 = sbr.rel (%p364) target = $region108
        $region107: #{combined_wseg_dice.1} parent=95 // pred_region
          %367 = vst [vmem:[%s352] sm:$0xff] 0.0
          %368 = vst [vmem:[%s352 + $0x8] sm:$0xff] 0.0
          %369 = vst [vmem:[%s352 + $0x10] sm:$0xff] 0.0
          %370 = vst [vmem:[%s352 + $0x18] sm:$0xff] 0.0
          %371 = vst [vmem:[%s352 + $0x20] sm:$0xff] 0.0
          %372 = vst [vmem:[%s352 + $0x28] sm:$0xff] 0.0
          %373 = vst [vmem:[%s352 + $0x30] sm:$0xff] 0.0
          %374 = vst [vmem:[%s352 + $0x38] sm:$0xff] 0.0
          %375 = vst [vmem:[%s357] sm:$0xff] 0.0
          %376 = vst [vmem:[%s357 + $0x8] sm:$0xff] 0.0
          %377 = vst [vmem:[%s357 + $0x10] sm:$0xff] 0.0
          %378 = vst [vmem:[%s357 + $0x18] sm:$0xff] 0.0
          %379 = vst [vmem:[%s357 + $0x20] sm:$0xff] 0.0
          %380 = vst [vmem:[%s357 + $0x28] sm:$0xff] 0.0
          %381 = vst [vmem:[%s357 + $0x30] sm:$0xff] 0.0
          %382 = vst [vmem:[%s357 + $0x38] sm:$0xff] 0.0
          %383 = vst [vmem:[%s362] sm:$0xff] 0.0
          %384 = vst [vmem:[%s362 + $0x8] sm:$0xff] 0.0
        $region108: #{combined_wseg_dice.1} parent=95 // pred_fallthru
          _
        %v385 = vld [vmem:[%s302] sm:$0xff]
        %v386 = vld [vmem:[%s302 + $0x8] sm:$0xff]
        %v387 = vld [vmem:[%s302 + $0x10] sm:$0xff]
        %v388 = vld [vmem:[%s302 + $0x18] sm:$0xff]
        %v389 = vld [vmem:[%s302 + $0x20] sm:$0xff]
        %v390 = vld [vmem:[%s302 + $0x28] sm:$0xff]
        %v391 = vld [vmem:[%s302 + $0x30] sm:$0xff]
        %v392 = vld [vmem:[%s302 + $0x38] sm:$0xff]
        %v393 = vld [vmem:[%s309] sm:$0xff]
        %v394 = vld [vmem:[%s309 + $0x8] sm:$0xff]
        %v395 = vcvt.f32.s32.to.zero.pseudo %v393
        %v396 = vcvt.f32.s32.to.zero.pseudo %v394
        %v397 = vmax.f32 %v385, %v387
        %v398 = vmax.f32 %v386, %v388
        %v399 = vmax.f32 %v397, %v398
        %v400 = vmax.f32 %v389, %v391
        %v401 = vmax.f32 %v390, %v392
        %v402 = vmax.f32 %v400, %v401
        %v403 = vsub.f32 %v385, %v399
        %v404 = vsub.f32 %v386, %v399
        %v405 = vsub.f32 %v387, %v399
        %v406 = vsub.f32 %v388, %v399
        %v407 = vsub.f32 %v389, %v402
        %v408 = vsub.f32 %v390, %v402
        %v409 = vsub.f32 %v391, %v402
        %v410 = vsub.f32 %v392, %v402
        %v411 = vmul.f32 %v403, 1.442695
        %v412 = vpow.pop %v411
        %v413 = vmul.f32 %v404, 1.442695
        %v414 = vpow.pop %v413
        %v415 = vmul.f32 %v405, 1.442695
        %v416 = vpow.pop %v415
        %v417 = vmul.f32 %v406, 1.442695
        %v418 = vpow.pop %v417
        %v419 = vmul.f32 %v407, 1.442695
        %v420 = vpow.pop %v419
        %v421 = vmul.f32 %v408, 1.442695
        %v422 = vpow.pop %v421
        %v423 = vmul.f32 %v409, 1.442695
        %v424 = vpow.pop %v423
        %v425 = vmul.f32 %v410, 1.442695
        %v426 = vpow.pop %v425
        %v427 = vadd.f32 %v412, %v414
        %v428 = vadd.f32 %v427, %v416
        %v429 = vadd.f32 %v428, %v418
        %v430 = vadd.f32 %v420, %v422
        %v431 = vadd.f32 %v430, %v424
        %v432 = vadd.f32 %v431, %v426
        %v433 = vrcp.pop %v429
        %v434 = vrcp.pop %v432
        %v435 = vmul.f32 %v429, %v433
        %v436 = vmul.f32 %v432, %v434
        %v437 = vsub.f32 2.0, %v435
        %v438 = vsub.f32 2.0, %v436
        %v439 = vmul.f32 %v433, %v437
        %v440 = vmul.f32 %v434, %v438
        %v441 = vmul.f32 %v412, %v439
        %v442 = vmul.f32 %v414, %v439
        %v443 = vmul.f32 %v416, %v439
        %v444 = vmul.f32 %v418, %v439
        %v445 = vmul.f32 %v420, %v440
        %v446 = vmul.f32 %v422, %v440
        %v447 = vmul.f32 %v424, %v440
        %v448 = vmul.f32 %v426, %v440
        %v449 = vlog2.pop %v429
        %v450 = vmul.f32 %v449, 0.6931472
        %v451 = vlog2.pop %v432
        %v452 = vmul.f32 %v451, 0.6931472
        %vm453 = vcmp.eq.s32.totalorder %v395, 0
        %vm454 = vcmp.eq.s32.totalorder %v395, 1
        %vm455 = vcmp.eq.s32.totalorder %v395, 2
        %vm456 = vcmp.eq.s32.totalorder %v395, 3
        %vm457 = vcmp.eq.s32.totalorder %v396, 0
        %vm458 = vcmp.eq.s32.totalorder %v396, 1
        %vm459 = vcmp.eq.s32.totalorder %v396, 2
        %vm460 = vcmp.eq.s32.totalorder %v396, 3
        %v461 = vsel %vm453, %v441, 0.0
        %v462 = vsel %vm454, %v442, 0.0
        %v463 = vsel %vm455, %v443, 0.0
        %v464 = vsel %vm456, %v444, 0.0
        %v465 = vsel %vm457, %v445, 0.0
        %v466 = vsel %vm458, %v446, 0.0
        %v467 = vsel %vm459, %v447, 0.0
        %v468 = vsel %vm460, %v448, 0.0
        %v469 = vmul.f32 %v441, %v441
        %v470 = vmul.f32 %v442, %v442
        %v471 = vmul.f32 %v443, %v443
        %v472 = vmul.f32 %v444, %v444
        %v473 = vmul.f32 %v445, %v445
        %v474 = vmul.f32 %v446, %v446
        %v475 = vmul.f32 %v447, %v447
        %v476 = vmul.f32 %v448, %v448
        %v477 = vadd.f32 %v469, 1.0
        %v478 = vadd.f32 %v470, 1.0
        %v479 = vadd.f32 %v471, 1.0
        %v480 = vadd.f32 %v472, 1.0
        %v481 = vadd.f32 %v473, 1.0
        %v482 = vadd.f32 %v474, 1.0
        %v483 = vadd.f32 %v475, 1.0
        %v484 = vadd.f32 %v476, 1.0
        %v485 = vsel %vm453, %v477, %v469
        %v486 = vsel %vm454, %v478, %v470
        %v487 = vsel %vm455, %v479, %v471
        %v488 = vsel %vm456, %v480, %v472
        %v489 = vsel %vm457, %v481, %v473
        %v490 = vsel %vm458, %v482, %v474
        %v491 = vsel %vm459, %v483, %v475
        %v492 = vsel %vm460, %v484, %v476
        %v493 = vsel %vm453, %v403, 0.0
        %v494 = vsel %vm454, %v404, 0.0
        %v495 = vsel %vm455, %v405, 0.0
        %v496 = vsel %vm456, %v406, 0.0
        %v497 = vsel %vm457, %v407, 0.0
        %v498 = vsel %vm458, %v408, 0.0
        %v499 = vsel %vm459, %v409, 0.0
        %v500 = vsel %vm460, %v410, 0.0
        %v501 = vadd.f32 %v493, %v494
        %v502 = vadd.f32 %v501, %v495
        %v503 = vadd.f32 %v502, %v496
        %v504 = vadd.f32 %v497, %v498
        %v505 = vadd.f32 %v504, %v499
        %v506 = vadd.f32 %v505, %v500
        %v507 = vsub.f32 %v450, %v503
        %v508 = vsub.f32 %v452, %v506
        %v509 = vld [vmem:[%s352] sm:$0xff]
        %v510 = vld [vmem:[%s352 + $0x8] sm:$0xff]
        %v511 = vld [vmem:[%s352 + $0x10] sm:$0xff]
        %v512 = vld [vmem:[%s352 + $0x18] sm:$0xff]
        %v513 = vld [vmem:[%s352 + $0x20] sm:$0xff]
        %v514 = vld [vmem:[%s352 + $0x28] sm:$0xff]
        %v515 = vld [vmem:[%s352 + $0x30] sm:$0xff]
        %v516 = vld [vmem:[%s352 + $0x38] sm:$0xff]
        %v517 = vadd.f32 %v461, 0.0
        %v518 = vadd.f32 %v462, 0.0
        %v519 = vadd.f32 %v463, 0.0
        %v520 = vadd.f32 %v464, 0.0
        %v521 = vadd.f32 %v465, 0.0
        %v522 = vadd.f32 %v466, 0.0
        %v523 = vadd.f32 %v467, 0.0
        %v524 = vadd.f32 %v468, 0.0
        %v525 = vadd.f32 %v509, %v517
        %v526 = vadd.f32 %v510, %v518
        %v527 = vadd.f32 %v511, %v519
        %v528 = vadd.f32 %v512, %v520
        %v529 = vadd.f32 %v513, %v521
        %v530 = vadd.f32 %v514, %v522
        %v531 = vadd.f32 %v515, %v523
        %v532 = vadd.f32 %v516, %v524
        %533 = vst [vmem:[%s352] sm:$0xff] %v525
        %534 = vst [vmem:[%s352 + $0x8] sm:$0xff] %v526
        %535 = vst [vmem:[%s352 + $0x10] sm:$0xff] %v527
        %536 = vst [vmem:[%s352 + $0x18] sm:$0xff] %v528
        %537 = vst [vmem:[%s352 + $0x20] sm:$0xff] %v529
        %538 = vst [vmem:[%s352 + $0x28] sm:$0xff] %v530
        %539 = vst [vmem:[%s352 + $0x30] sm:$0xff] %v531
        %540 = vst [vmem:[%s352 + $0x38] sm:$0xff] %v532
        %v541 = vld [vmem:[%s357] sm:$0xff]
        %v542 = vld [vmem:[%s357 + $0x8] sm:$0xff]
        %v543 = vld [vmem:[%s357 + $0x10] sm:$0xff]
        %v544 = vld [vmem:[%s357 + $0x18] sm:$0xff]
        %v545 = vld [vmem:[%s357 + $0x20] sm:$0xff]
        %v546 = vld [vmem:[%s357 + $0x28] sm:$0xff]
        %v547 = vld [vmem:[%s357 + $0x30] sm:$0xff]
        %v548 = vld [vmem:[%s357 + $0x38] sm:$0xff]
        %v549 = vadd.f32 %v485, 0.0
        %v550 = vadd.f32 %v486, 0.0
        %v551 = vadd.f32 %v487, 0.0
        %v552 = vadd.f32 %v488, 0.0
        %v553 = vadd.f32 %v489, 0.0
        %v554 = vadd.f32 %v490, 0.0
        %v555 = vadd.f32 %v491, 0.0
        %v556 = vadd.f32 %v492, 0.0
        %v557 = vadd.f32 %v541, %v549
        %v558 = vadd.f32 %v542, %v550
        %v559 = vadd.f32 %v543, %v551
        %v560 = vadd.f32 %v544, %v552
        %v561 = vadd.f32 %v545, %v553
        %v562 = vadd.f32 %v546, %v554
        %v563 = vadd.f32 %v547, %v555
        %v564 = vadd.f32 %v548, %v556
        %565 = vst [vmem:[%s357] sm:$0xff] %v557
        %566 = vst [vmem:[%s357 + $0x8] sm:$0xff] %v558
        %567 = vst [vmem:[%s357 + $0x10] sm:$0xff] %v559
        %568 = vst [vmem:[%s357 + $0x18] sm:$0xff] %v560
        %569 = vst [vmem:[%s357 + $0x20] sm:$0xff] %v561
        %570 = vst [vmem:[%s357 + $0x28] sm:$0xff] %v562
        %571 = vst [vmem:[%s357 + $0x30] sm:$0xff] %v563
        %572 = vst [vmem:[%s357 + $0x38] sm:$0xff] %v564
        %v573 = vld [vmem:[%s362] sm:$0xff]
        %v574 = vld [vmem:[%s362 + $0x8] sm:$0xff]
        %v575 = vadd.f32 %v507, 0.0
        %v576 = vadd.f32 %v508, 0.0
        %v577 = vadd.f32 %v573, %v575
        %v578 = vadd.f32 %v574, %v576
        %579 = vst [vmem:[%s362] sm:$0xff] %v577
        %580 = vst [vmem:[%s362 + $0x8] sm:$0xff] %v578
        %p581 = scmp.lt.s32.totalorder %s20, 1
        %s582 = scalar_select %p581, %s20, 1
        %s583 = smul.addr %s582, 8
        %s584 = smul.addr %s583, 8
        %s585 = scalar_lea.vmem %s2, %s584
        %p586 = scmp.lt.s32.totalorder %s20, 1
        %s587 = scalar_select %p586, %s20, 1
        %s588 = smul.addr %s587, 8
        %s589 = smul.addr %s588, 8
        %s590 = scalar_lea.vmem %s3, %s589
        %p591 = scmp.lt.s32.totalorder %s20, 1
        %s592 = scalar_select %p591, %s20, 1
        %s593 = smul.addr %s592, 2
        %s594 = smul.addr %s593, 8
        %s595 = scalar_lea.vmem %s4, %s594
        // Predicated region
        $region109: #{combined_wseg_dice.1} parent=95 // pred_check
          %p596 = pneg %p102
        $region110: #{combined_wseg_dice.1} parent=95 // pred_check_branch
          %598 = sbr.rel (%p596) target = $region112
        $region111: #{combined_wseg_dice.1} parent=95 // pred_region
          _
        $region112: #{combined_wseg_dice.1} parent=95 // pred_fallthru
          _
        // Predicated region
        $region113: #{combined_wseg_dice.1} parent=95 // pred_check
          %p599 = pneg %p128
        $region114: #{combined_wseg_dice.1} parent=95 // pred_check_branch
          %601 = sbr.rel (%p599) target = $region116
        $region115: #{combined_wseg_dice.1} parent=95 // pred_region
          _
        $region116: #{combined_wseg_dice.1} parent=95 // pred_fallthru
          _
        // Predicated region
        $region117: #{combined_wseg_dice.1} parent=95 // pred_check
          %p602 = pneg %p154
        $region118: #{combined_wseg_dice.1} parent=95 // pred_check_branch
          %604 = sbr.rel (%p602) target = $region120
        $region119: #{combined_wseg_dice.1} parent=95 // pred_region
          _
        $region120: #{combined_wseg_dice.1} parent=95 // pred_fallthru
          _
      $region96: #{combined_wseg_dice.1} parent=5 // pred_fallthru
        _
      %p605 = scmp.le.s32.totalorder 2, %s11
      // Predicated region
      $region121: #{combined_wseg_dice.1} parent=5 // pred_check
        %p606 = pneg %p605
      $region122: #{combined_wseg_dice.1} parent=5 // pred_check_branch
        %608 = sbr.rel (%p606) target = $region124
      $region123: #{combined_wseg_dice.1} parent=5 // pred_region
        %s609 = ssub.s32 %s11, 2
        // Predicated region
        $region125: #{combined_wseg_dice.1} parent=123 // pred_check
          %p610 = pneg %p108
        $region126: #{combined_wseg_dice.1} parent=123 // pred_check_branch
          %612 = sbr.rel (%p610) target = $region128
        $region127: #{combined_wseg_dice.1} parent=123 // pred_region
          %p613 = scmp.lt.s32.totalorder %s22, 1
          %s614 = scalar_select %p613, %s22, 1
          %s615 = smul.addr %s614, 8
          %s616 = smul.addr %s615, 8
          %s617 = scalar_lea.vmem %s2, %s616
        $region128: #{combined_wseg_dice.1} parent=123 // pred_fallthru
          _
        // Predicated region
        $region129: #{combined_wseg_dice.1} parent=123 // pred_check
          %p618 = pneg %p134
        $region130: #{combined_wseg_dice.1} parent=123 // pred_check_branch
          %620 = sbr.rel (%p618) target = $region132
        $region131: #{combined_wseg_dice.1} parent=123 // pred_region
          %p621 = scmp.lt.s32.totalorder %s22, 1
          %s622 = scalar_select %p621, %s22, 1
          %s623 = smul.addr %s622, 8
          %s624 = smul.addr %s623, 8
          %s625 = scalar_lea.vmem %s3, %s624
        $region132: #{combined_wseg_dice.1} parent=123 // pred_fallthru
          _
        // Predicated region
        $region133: #{combined_wseg_dice.1} parent=123 // pred_check
          %p626 = pneg %p160
        $region134: #{combined_wseg_dice.1} parent=123 // pred_check_branch
          %628 = sbr.rel (%p626) target = $region136
        $region135: #{combined_wseg_dice.1} parent=123 // pred_region
          %p629 = scmp.lt.s32.totalorder %s22, 1
          %s630 = scalar_select %p629, %s22, 1
          %s631 = smul.addr %s630, 2
          %s632 = smul.addr %s631, 8
          %s633 = scalar_lea.vmem %s4, %s632
        $region136: #{combined_wseg_dice.1} parent=123 // pred_fallthru
          _
      $region124: #{combined_wseg_dice.1} parent=5 // pred_fallthru
        _
    $region6: #{combined_wseg_dice.1} parent=1 // loop_footer
      %s15 = sadd.s32 1, %s11
    $region7: #{combined_wseg_dice.1} parent=1 // loop_footer_branch
      %10 = sbr.rel target = $region3
    $region8: #{combined_wseg_dice.1} parent=1 // loop_exit
      _

</llo_original>
